<compile_context>
chip_gen: v7x
topology: tpu7x:2x2x1
jax: 0.10.0
libtpu: 0.0.40
codegen_flags: <defaults>
</compile_context>

<pallas_src>
import jax
import jax.numpy as jnp
from jax.experimental import pallas as pl
from jax.experimental.pallas import tpu as pltpu

_H1 = 256
_H2 = 64
_A_PAD = 128          # lane-dense output width
_MAX_TB = 256         # batch tile (rows per grid step)


def _round_up(x, m):
    return ((x + m - 1) // m) * m


def _policy_kernel(x_ref, w1_ref, b1_ref, w2_ref, b2_ref, w3_ref, b3_ref,
                   mean_ref):
    # Layer 1: Linear(S -> 256) + ReLU.  bf16 operands, f32 MXU accumulate.
    h1 = jnp.dot(x_ref[...], w1_ref[...], preferred_element_type=jnp.float32)
    h1 = jnp.maximum(h1 + b1_ref[...], 0.0).astype(jnp.bfloat16)

    # Layer 2: Linear(256 -> 64) + ReLU.
    h2 = jnp.dot(h1, w2_ref[...], preferred_element_type=jnp.float32)
    h2 = jnp.maximum(h2 + b2_ref[...], 0.0).astype(jnp.bfloat16)

    # Layer 3: Linear(64 -> A_pad), no activation.  Lane-dense (128-wide) store.
    mean_ref[...] = (jnp.dot(h2, w3_ref[...], preferred_element_type=jnp.float32)
                     + b3_ref[...]).astype(mean_ref.dtype)


def policy_model_forward(states, params):
    """states: (B, state_dim) f32.  Returns (mean (B, A) f32, std (A,) f32)."""
    w1, b1, w2, b2, w3, b3, actor_std = params
    B, S = states.shape
    A = w3.shape[1]

    # Zero-pad layer-3 weights/bias out to 128 lanes (padded columns stay 0).
    w3_p = jnp.zeros((_H2, _A_PAD), w3.dtype).at[:, :A].set(w3)
    b3_p = jnp.zeros((1, _A_PAD), b3.dtype).at[:, :A].set(b3)

    # Batch tile: at least 8 (sublane), at most _MAX_TB; pad B to a multiple.
    TB = min(_MAX_TB, _round_up(B, 8))
    B_pad = _round_up(B, TB)
    x = states
    if B_pad != B:
        x = jnp.zeros((B_pad, S), states.dtype).at[:B].set(states)

    # bf16 inputs, f32 accumulation inside the kernel.
    x_bf = x.astype(jnp.bfloat16)
    w1_bf = w1.astype(jnp.bfloat16)
    w2_bf = w2.astype(jnp.bfloat16)
    w3_bf = w3_p.astype(jnp.bfloat16)

    grid = (B_pad // TB,)

    flops = 2 * B_pad * (S * _H1 + _H1 * _H2 + _H2 * _A_PAD)
    bytes_accessed = (
        x_bf.size * 2 + B_pad * _A_PAD * 4                       # states + mean
        + (w1_bf.size + w2_bf.size + w3_bf.size) * 2             # bf16 weights
        + (b1.size + b2.size + b3_p.size) * 4)                   # f32 biases

    mean_padded = pl.pallas_call(
        _policy_kernel,
        out_shape=jax.ShapeDtypeStruct((B_pad, _A_PAD), jnp.float32),
        grid=grid,
        in_specs=[
            pl.BlockSpec((TB, S), lambda i: (i, 0)),        # states tile
            pl.BlockSpec((S, _H1), lambda i: (0, 0)),       # w1 (resident)
            pl.BlockSpec((1, _H1), lambda i: (0, 0)),       # b1
            pl.BlockSpec((_H1, _H2), lambda i: (0, 0)),     # w2
            pl.BlockSpec((1, _H2), lambda i: (0, 0)),       # b2
            pl.BlockSpec((_H2, _A_PAD), lambda i: (0, 0)),  # w3 (padded)
            pl.BlockSpec((1, _A_PAD), lambda i: (0, 0)),    # b3 (padded)
        ],
        out_specs=pl.BlockSpec((TB, _A_PAD), lambda i: (i, 0)),
        compiler_params=pltpu.CompilerParams(
            dimension_semantics=("parallel",),
            vmem_limit_bytes=32 * 1024 * 1024,   # safe on v5e/v6e/v7x
        ),
        cost_estimate=pl.CostEstimate(
            flops=flops, transcendentals=0, bytes_accessed=bytes_accessed),
    )(x_bf, w1_bf, b1, w2_bf, b2, w3_bf, b3_p)

    mean = mean_padded[:B, :A]
    # std = exp(actor_std): tiny, batch-independent -> plain jnp, not a kernel op.
    std = jnp.exp(actor_std.reshape(-1))
    return mean, std


def init_params(key, state_dim, action_dim):
    """Deterministic synthetic parameters matching Policy_Model.__init__ shapes."""
    ks = jax.random.split(key, 6)
    # Stored as (in, out) -> kernel computes x @ W + b.
    w1 = jax.random.normal(ks[0], (state_dim, _H1), jnp.float32) * 0.05
    b1 = jax.random.normal(ks[1], (1, _H1), jnp.float32) * 0.01
    w2 = jax.random.normal(ks[2], (_H1, _H2), jnp.float32) * 0.05
    b2 = jax.random.normal(ks[3], (1, _H2), jnp.float32) * 0.01
    w3 = jax.random.normal(ks[4], (_H2, action_dim), jnp.float32) * 0.05
    b3 = jax.random.normal(ks[5], (1, action_dim), jnp.float32) * 0.01
    actor_std = jnp.zeros((1, action_dim), jnp.float32)  # nn.Parameter(torch.zeros(A))
    return (w1, b1, w2, b2, w3, b3, actor_std)


def reference_forward(states, params):
    w1, b1, w2, b2, w3, b3, actor_std = params
    h1 = jnp.maximum(states @ w1 + b1, 0.0)
    h2 = jnp.maximum(h1 @ w2 + b2, 0.0)
    mean = h2 @ w3 + b3
    std = jnp.exp(actor_std).reshape(-1)
    return mean, std


if __name__ == "__main__":
    STATE_DIM = 32
    ACTION_DIM = 8
    BATCH = 2

    key = jax.random.PRNGKey(0)
    pkey, xkey = jax.random.split(key)
    params = init_params(pkey, STATE_DIM, ACTION_DIM)
    states = jax.random.normal(xkey, (BATCH, STATE_DIM), jnp.float32)

    mean, std = policy_model_forward(states, params)
    jax.block_until_ready((mean, std))

    ref_mean, ref_std = reference_forward(states, params)
    assert mean.shape == (BATCH, ACTION_DIM)
    assert std.shape == (ACTION_DIM,)
    # bf16 matmul inputs with f32 accumulation -> looser tolerance vs f32 ref.
    assert jnp.allclose(mean, ref_mean, atol=2e-2, rtol=2e-2)
    assert jnp.allclose(std, ref_std, atol=1e-6, rtol=1e-6)

    print("KERNEL_OK")
</pallas_src>

<mosaic_0001>
module attributes {stable_mosaic.version = 11 : i64} {
  func.func @_policy_kernel(%arg0: i32, %arg1: memref<8x32xbf16, #tpu.memory_space<vmem>>, %arg2: memref<32x256xbf16, #tpu.memory_space<vmem>>, %arg3: memref<1x256xf32, #tpu.memory_space<vmem>>, %arg4: memref<256x64xbf16, #tpu.memory_space<vmem>>, %arg5: memref<1x64xf32, #tpu.memory_space<vmem>>, %arg6: memref<64x128xbf16, #tpu.memory_space<vmem>>, %arg7: memref<1x128xf32, #tpu.memory_space<vmem>>, %arg8: memref<8x128xf32, #tpu.memory_space<vmem>>) attributes {dimension_semantics = [#tpu.dimension_semantics<parallel>], iteration_bounds = array<i64: 1>, scalar_prefetch = 0 : i64, scratch_operands = 0 : i64, tpu.core_type = #tpu.core_type<tc>, window_params = [{transform_indices = @transform_0, window_bounds = array<i64: 8, 32>}, {pipeline_mode = #tpu.pipeline_mode<synchronous>, transform_indices = @transform_1, window_bounds = array<i64: 32, 256>}, {pipeline_mode = #tpu.pipeline_mode<synchronous>, transform_indices = @transform_2, window_bounds = array<i64: 1, 256>}, {pipeline_mode = #tpu.pipeline_mode<synchronous>, transform_indices = @transform_3, window_bounds = array<i64: 256, 64>}, {pipeline_mode = #tpu.pipeline_mode<synchronous>, transform_indices = @transform_4, window_bounds = array<i64: 1, 64>}, {pipeline_mode = #tpu.pipeline_mode<synchronous>, transform_indices = @transform_5, window_bounds = array<i64: 64, 128>}, {pipeline_mode = #tpu.pipeline_mode<synchronous>, transform_indices = @transform_6, window_bounds = array<i64: 1, 128>}, {transform_indices = @transform_7, window_bounds = array<i64: 8, 128>}]} {
    %c0 = arith.constant 0 : index
    %c0_0 = arith.constant 0 : index
    %0 = vector.load %arg1[%c0, %c0_0] : memref<8x32xbf16, #tpu.memory_space<vmem>>, vector<8x32xbf16>
    %c0_1 = arith.constant 0 : index
    %c0_2 = arith.constant 0 : index
    %1 = vector.load %arg2[%c0_1, %c0_2] : memref<32x256xbf16, #tpu.memory_space<vmem>>, vector<32x256xbf16>
    %cst = arith.constant dense<0.000000e+00> : vector<8x256xf32>
    %2 = tpu.matmul %0, %1, %cst {dimension_numbers = #tpu.dot_dimension_numbers<[1], [0], [0], [1], [0, 0, 1, 1], [], []>} : vector<8x32xbf16>, vector<32x256xbf16>, vector<8x256xf32> -> vector<8x256xf32>
    %c0_3 = arith.constant 0 : index
    %c0_4 = arith.constant 0 : index
    %3 = vector.load %arg3[%c0_3, %c0_4] : memref<1x256xf32, #tpu.memory_space<vmem>>, vector<1x256xf32>
    %4 = vector.broadcast %3 : vector<1x256xf32> to vector<8x256xf32>
    %5 = arith.addf %2, %4 : vector<8x256xf32>
    %cst_5 = arith.constant 0.000000e+00 : f32
    %6 = vector.broadcast %cst_5 : f32 to vector<8x256xf32>
    %7 = arith.maximumf %5, %6 : vector<8x256xf32>
    %8 = arith.truncf %7 : vector<8x256xf32> to vector<8x256xbf16>
    %c0_6 = arith.constant 0 : index
    %c0_7 = arith.constant 0 : index
    %9 = vector.load %arg4[%c0_6, %c0_7] : memref<256x64xbf16, #tpu.memory_space<vmem>>, vector<256x64xbf16>
    %cst_8 = arith.constant dense<0.000000e+00> : vector<8x64xf32>
    %10 = tpu.matmul %8, %9, %cst_8 {dimension_numbers = #tpu.dot_dimension_numbers<[1], [0], [0], [1], [0, 0, 1, 1], [], []>} : vector<8x256xbf16>, vector<256x64xbf16>, vector<8x64xf32> -> vector<8x64xf32>
    %c0_9 = arith.constant 0 : index
    %c0_10 = arith.constant 0 : index
    %11 = vector.load %arg5[%c0_9, %c0_10] : memref<1x64xf32, #tpu.memory_space<vmem>>, vector<1x64xf32>
    %12 = vector.broadcast %11 : vector<1x64xf32> to vector<8x64xf32>
    %13 = arith.addf %10, %12 : vector<8x64xf32>
    %cst_11 = arith.constant 0.000000e+00 : f32
    %14 = vector.broadcast %cst_11 : f32 to vector<8x64xf32>
    %15 = arith.maximumf %13, %14 : vector<8x64xf32>
    %16 = arith.truncf %15 : vector<8x64xf32> to vector<8x64xbf16>
    %c0_12 = arith.constant 0 : index
    %c0_13 = arith.constant 0 : index
    %17 = vector.load %arg6[%c0_12, %c0_13] : memref<64x128xbf16, #tpu.memory_space<vmem>>, vector<64x128xbf16>
    %cst_14 = arith.constant dense<0.000000e+00> : vector<8x128xf32>
    %18 = tpu.matmul %16, %17, %cst_14 {dimension_numbers = #tpu.dot_dimension_numbers<[1], [0], [0], [1], [0, 0, 1, 1], [], []>} : vector<8x64xbf16>, vector<64x128xbf16>, vector<8x128xf32> -> vector<8x128xf32>
    %c0_15 = arith.constant 0 : index
    %c0_16 = arith.constant 0 : index
    %19 = vector.load %arg7[%c0_15, %c0_16] : memref<1x128xf32, #tpu.memory_space<vmem>>, vector<1x128xf32>
    %20 = vector.broadcast %19 : vector<1x128xf32> to vector<8x128xf32>
    %21 = arith.addf %18, %20 : vector<8x128xf32>
    %c0_17 = arith.constant 0 : index
    %c0_18 = arith.constant 0 : index
    %22 = vector.load %arg8[%c0_17, %c0_18] : memref<8x128xf32, #tpu.memory_space<vmem>>, vector<8x128xf32>
    tpu.vector_store %arg8[%c0_17, %c0_18], %21 {strides = array<i32>} : memref<8x128xf32, #tpu.memory_space<vmem>>, vector<8x128xf32>,
    return
  }
  func.func @transform_0(%arg0: i32) -> (i32, i32) {
    %c0_i32 = arith.constant 0 : i32
    %c0_i32_0 = arith.constant 0 : i32
    return %arg0, %c0_i32 : i32, i32
  }
  func.func @transform_1(%arg0: i32) -> (i32, i32) {
    %c0_i32 = arith.constant 0 : i32
    %c0_i32_0 = arith.constant 0 : i32
    %c0_i32_1 = arith.constant 0 : i32
    return %c0_i32, %c0_i32_0 : i32, i32
  }
  func.func @transform_2(%arg0: i32) -> (i32, i32) {
    %c0_i32 = arith.constant 0 : i32
    %c0_i32_0 = arith.constant 0 : i32
    %c0_i32_1 = arith.constant 0 : i32
    return %c0_i32, %c0_i32_0 : i32, i32
  }
  func.func @transform_3(%arg0: i32) -> (i32, i32) {
    %c0_i32 = arith.constant 0 : i32
    %c0_i32_0 = arith.constant 0 : i32
    %c0_i32_1 = arith.constant 0 : i32
    return %c0_i32, %c0_i32_0 : i32, i32
  }
  func.func @transform_4(%arg0: i32) -> (i32, i32) {
    %c0_i32 = arith.constant 0 : i32
    %c0_i32_0 = arith.constant 0 : i32
    %c0_i32_1 = arith.constant 0 : i32
    return %c0_i32, %c0_i32_0 : i32, i32
  }
  func.func @transform_5(%arg0: i32) -> (i32, i32) {
    %c0_i32 = arith.constant 0 : i32
    %c0_i32_0 = arith.constant 0 : i32
    %c0_i32_1 = arith.constant 0 : i32
    return %c0_i32, %c0_i32_0 : i32, i32
  }
  func.func @transform_6(%arg0: i32) -> (i32, i32) {
    %c0_i32 = arith.constant 0 : i32
    %c0_i32_0 = arith.constant 0 : i32
    %c0_i32_1 = arith.constant 0 : i32
    return %c0_i32, %c0_i32_0 : i32, i32
  }
  func.func @transform_7(%arg0: i32) -> (i32, i32) {
    %c0_i32 = arith.constant 0 : i32
    %c0_i32_0 = arith.constant 0 : i32
    return %arg0, %c0_i32 : i32, i32
  }
}

</mosaic_0001>

<llo_original>
// kernel: tpu_custom_call.1
$region0: #{tpu_custom_call.1}
  #allocation0 [shape = 'u32[]', space=smem, size = 0x4, offset = 0x4, fixed_abs, tag = 'smem constant byte address 0x4 - core index']
  #allocation1 [shape = 'u32[144,128]{1,0:T(1,128)}', space=vmem, size = 0x12000, scoped, tag = 'internal scratch']
  %s0 = inlined_call_operand.vmem [shape: bf16[8,32], index: 0, kind: input, shape index: {}]
  %s1 = inlined_call_operand.vmem [shape: bf16[32,256], index: 1, kind: input, shape index: {}]
  %s2 = inlined_call_operand.vmem [shape: f32[1,256], index: 2, kind: input, shape index: {}]
  %s3 = inlined_call_operand.vmem [shape: bf16[256,64], index: 3, kind: input, shape index: {}]
  %s4 = inlined_call_operand.vmem [shape: f32[1,64], index: 4, kind: input, shape index: {}]
  %s5 = inlined_call_operand.vmem [shape: bf16[64,128], index: 5, kind: input, shape index: {}]
  %s6 = inlined_call_operand.vmem [shape: f32[1,128], index: 6, kind: input, shape index: {}]
  %s7 = inlined_call_operand.hbm [shape: f32[8,128], index: 7, kind: output, shape index: {}]
  %s8 = sld [smem:[#allocation0]]
  $region38: #{tpu_custom_call.1} parent=0
    _
  %s10 = ssub.s32 1, %s8
  %s11 = scalar_select 0, %s10, %s8
  $region1: #{tpu_custom_call.1} parent=0
    #allocation2 [shape = 'u8[4096]{0}', space=vmem, size = 0x1000, scoped, tag = 'output window, operand 0, single buffered']
    #allocation3 [shape = 's32[1]{0}', space=sflag, size = 0x4, scoped, tag = 'scoped memory for tpu_custom_call.1']
    %12 = vsyncpa [#allocation3], 0
    // Predicated region
    $region2: #{tpu_custom_call.1} parent=1 // pred_check
      _
    $region3: #{tpu_custom_call.1} parent=1 // pred_check_branch
      %14 = sbr.rel (0) target = $region5
    $region4: #{tpu_custom_call.1} parent=1 // pred_region
      _
    $region5: #{tpu_custom_call.1} parent=1 // pred_fallthru
      _
    // Predicated region
    $region6: #{tpu_custom_call.1} parent=1 // pred_check
      _
    $region7: #{tpu_custom_call.1} parent=1 // pred_check_branch
      %16 = sbr.rel (0) target = $region9
    $region8: #{tpu_custom_call.1} parent=1 // pred_region
      _
    $region9: #{tpu_custom_call.1} parent=1 // pred_fallthru
      _
    // Predicated region
    $region10: #{tpu_custom_call.1} parent=1 // pred_check
      _
    $region11: #{tpu_custom_call.1} parent=1 // pred_check_branch
      %18 = sbr.rel (0) target = $region13
    $region12: #{tpu_custom_call.1} parent=1 // pred_region
      _
    $region13: #{tpu_custom_call.1} parent=1 // pred_fallthru
      _
    // Predicated region
    $region14: #{tpu_custom_call.1} parent=1 // pred_check
      _
    $region15: #{tpu_custom_call.1} parent=1 // pred_check_branch
      %20 = sbr.rel (0) target = $region17
    $region16: #{tpu_custom_call.1} parent=1 // pred_region
      _
    $region17: #{tpu_custom_call.1} parent=1 // pred_fallthru
      _
    // Predicated region
    $region18: #{tpu_custom_call.1} parent=1 // pred_check
      _
    $region19: #{tpu_custom_call.1} parent=1 // pred_check_branch
      %22 = sbr.rel (0) target = $region21
    $region20: #{tpu_custom_call.1} parent=1 // pred_region
      _
    $region21: #{tpu_custom_call.1} parent=1 // pred_fallthru
      _
    // Predicated region
    $region22: #{tpu_custom_call.1} parent=1 // pred_check
      _
    $region23: #{tpu_custom_call.1} parent=1 // pred_check_branch
      %24 = sbr.rel (0) target = $region25
    $region24: #{tpu_custom_call.1} parent=1 // pred_region
      _
    $region25: #{tpu_custom_call.1} parent=1 // pred_fallthru
      _
    // Predicated region
    $region26: #{tpu_custom_call.1} parent=1 // pred_check
      _
    $region27: #{tpu_custom_call.1} parent=1 // pred_check_branch
      %26 = sbr.rel (0) target = $region29
    $region28: #{tpu_custom_call.1} parent=1 // pred_region
      _
    $region29: #{tpu_custom_call.1} parent=1 // pred_fallthru
      _
    %v28 = vld [vmem:[%s0] sm:$0xf]
    %v29 = vld [vmem:[%s1] sm:$0xff]
    %v30 = vld [vmem:[%s1 + $0x8] sm:$0xff]
    %v31 = vld [vmem:[%s1 + $0x10] sm:$0xff]
    %v32 = vld [vmem:[%s1 + $0x18] sm:$0xff]
    %v33 = vld [vmem:[%s2] sm:$0x3]
    %v35 = vlaneseq
    %v36 = vshrl.u32 %v35, 7
    %v37 = vsub.s32 0, %v36
    %v38 = vrot.slane %v33, %v37
    %v39 = vlaneseq
    %v40 = vshrl.u32 %v39, 7
    %v41 = vsub.s32 1, %v40
    %v42 = vrot.slane %v33, %v41
    %v49 = vunpack.c.l.b16 %v29
    %v50 = vunpack.c.h.b16 %v29
    %v51 = vunpack.c.l.b16 %v30
    %v52 = vunpack.c.h.b16 %v30
    %v53 = vunpack.c.l.b16 %v31
    %v54 = vunpack.c.h.b16 %v31
    %v55 = vunpack.c.l.b16 %v32
    %v56 = vunpack.c.h.b16 %v32
    %v57 = vpack.c.b16 %v51, %v49
    %v58 = vpack.c.b16 %v52, %v50
    %v59 = vpack.c.b16 %v55, %v53
    %v60 = vpack.c.b16 %v56, %v54
    %vm65 = vcmask 261120
    %v67 = vsel %vm65, %v28, 0
    %69 = vmatprep.subr.bf16.mxu0 %v58
    %70 = vmatpush1.bf16.msra.mxu0 %v57
    %71 = vmatprep.subr.bf16.mxu0 %v60
    %72 = vmatpush1.bf16.msra.mxu0 %v59
    %73 = vmatprep.subr.bf16.mxu0 0
    %74 = vmatpush1.bf16.msra.mxu0 0
    %75 = vmatprep.subr.bf16.mxu0 0
    %76 = vmatpush1.bf16.msra.mxu0 0
    %77 = vmatprep.subr.bf16.mxu0 0
    %78 = vmatpush1.bf16.msra.mxu0 0
    %79 = vmatprep.subr.bf16.mxu0 0
    %80 = vmatpush1.bf16.msra.mxu0 0
    %81 = vmatprep.subr.bf16.mxu0 0
    %82 = vmatpush1.bf16.msra.mxu0 0
    %83 = vmatprep.subr.bf16.mxu0 0
    %84 = vmatpush1.bf16.msra.mxu0 0
    %85 = vmatprep.subr.bf16.mxu0 0
    %86 = vmatpush1.bf16.msra.mxu0 0
    %87 = vmatprep.subr.bf16.mxu0 0
    %88 = vmatpush1.bf16.msra.mxu0 0
    %89 = vmatprep.subr.bf16.mxu0 0
    %90 = vmatpush1.bf16.msra.mxu0 0
    %91 = vmatprep.subr.bf16.mxu0 0
    %92 = vmatpush1.bf16.msra.mxu0 0
    %93 = vmatprep.subr.bf16.mxu0 0
    %94 = vmatpush1.bf16.msra.mxu0 0
    %95 = vmatprep.subr.bf16.mxu0 0
    %96 = vmatpush1.bf16.msra.mxu0 0
    %97 = vmatprep.subr.bf16.mxu0 0
    %98 = vmatpush1.bf16.msra.mxu0 0
    %99 = vmatprep.subr.bf16.mxu0 0
    %100 = vmatpush1.bf16.msra.mxu0 0
    %101 = vmatprep.mubr.bf16.mxu0 0
    %102 = vmatmul.mubr.bf16.gmra.mrb[0].mxu0 %v67
    %v103 = vpop.f32.mrb[0].mxu0
    %v104 = vadd.f32 %v38, %v103
    %v105 = vpop.f32.mrb[0].mxu0
    %v106 = vadd.f32 %v42, %v105
    %v107 = vpop.f32.mrb[0].mxu0
    %v108 = vpop.f32.mrb[0].mxu0
    %109 = vdwg.mxu0
    %v110 = vmax.f32 %v104, 0.0
    %v111 = vmax.f32 %v106, 0.0
    %v112 = vpack.c.bf16 %v110, %v110
    %v113 = vpack.c.bf16 %v111, %v111
    %v114 = vld [vmem:[%s3] sm:$0xf]
    %v115 = vld [vmem:[%s3 + $0x4] sm:$0xf]
    %v116 = vld [vmem:[%s3 + $0x8] sm:$0xf]
    %v117 = vld [vmem:[%s3 + $0xc] sm:$0xf]
    %v118 = vld [vmem:[%s3 + $0x10] sm:$0xf]
    %v119 = vld [vmem:[%s3 + $0x14] sm:$0xf]
    %v120 = vld [vmem:[%s3 + $0x18] sm:$0xf]
    %v121 = vld [vmem:[%s3 + $0x1c] sm:$0xf]
    %v122 = vld [vmem:[%s3 + $0x20] sm:$0xf]
    %v123 = vld [vmem:[%s3 + $0x24] sm:$0xf]
    %v124 = vld [vmem:[%s3 + $0x28] sm:$0xf]
    %v125 = vld [vmem:[%s3 + $0x2c] sm:$0xf]
    %v126 = vld [vmem:[%s3 + $0x30] sm:$0xf]
    %v127 = vld [vmem:[%s3 + $0x34] sm:$0xf]
    %v128 = vld [vmem:[%s3 + $0x38] sm:$0xf]
    %v129 = vld [vmem:[%s3 + $0x3c] sm:$0xf]
    %v130 = vld [vmem:[%s3 + $0x40] sm:$0xf]
    %v131 = vld [vmem:[%s3 + $0x44] sm:$0xf]
    %v132 = vld [vmem:[%s3 + $0x48] sm:$0xf]
    %v133 = vld [vmem:[%s3 + $0x4c] sm:$0xf]
    %v134 = vld [vmem:[%s3 + $0x50] sm:$0xf]
    %v135 = vld [vmem:[%s3 + $0x54] sm:$0xf]
    %v136 = vld [vmem:[%s3 + $0x58] sm:$0xf]
    %v137 = vld [vmem:[%s3 + $0x5c] sm:$0xf]
    %v138 = vld [vmem:[%s3 + $0x60] sm:$0xf]
    %v139 = vld [vmem:[%s3 + $0x64] sm:$0xf]
    %v140 = vld [vmem:[%s3 + $0x68] sm:$0xf]
    %v141 = vld [vmem:[%s3 + $0x6c] sm:$0xf]
    %v142 = vld [vmem:[%s3 + $0x70] sm:$0xf]
    %v143 = vld [vmem:[%s3 + $0x74] sm:$0xf]
    %v144 = vld [vmem:[%s3 + $0x78] sm:$0xf]
    %v145 = vld [vmem:[%s3 + $0x7c] sm:$0xf]
    %v146 = vld [vmem:[%s4] sm:$0x1]
    %v148 = vlaneseq
    %v149 = vshrl.u32 %v148, 7
    %v150 = vsub.s32 0, %v149
    %v151 = vrot.slane %v146, %v150
    %v185 = vunpack.c.l.b16 %v114
    %v186 = vunpack.c.l.b16 %v115
    %v187 = vunpack.c.l.b16 %v116
    %v188 = vunpack.c.l.b16 %v117
    %v189 = vunpack.c.l.b16 %v118
    %v190 = vunpack.c.l.b16 %v119
    %v191 = vunpack.c.l.b16 %v120
    %v192 = vunpack.c.l.b16 %v121
    %v193 = vunpack.c.l.b16 %v122
    %v194 = vunpack.c.l.b16 %v123
    %v195 = vunpack.c.l.b16 %v124
    %v196 = vunpack.c.l.b16 %v125
    %v197 = vunpack.c.l.b16 %v126
    %v198 = vunpack.c.l.b16 %v127
    %v199 = vunpack.c.l.b16 %v128
    %v200 = vunpack.c.l.b16 %v129
    %v201 = vunpack.c.l.b16 %v130
    %v202 = vunpack.c.l.b16 %v131
    %v203 = vunpack.c.l.b16 %v132
    %v204 = vunpack.c.l.b16 %v133
    %v205 = vunpack.c.l.b16 %v134
    %v206 = vunpack.c.l.b16 %v135
    %v207 = vunpack.c.l.b16 %v136
    %v208 = vunpack.c.l.b16 %v137
    %v209 = vunpack.c.l.b16 %v138
    %v210 = vunpack.c.l.b16 %v139
    %v211 = vunpack.c.l.b16 %v140
    %v212 = vunpack.c.l.b16 %v141
    %v213 = vunpack.c.l.b16 %v142
    %v214 = vunpack.c.l.b16 %v143
    %v215 = vunpack.c.l.b16 %v144
    %v216 = vunpack.c.l.b16 %v145
    %v217 = vpack.c.b16 %v186, %v185
    %v218 = vpack.c.b16 %v188, %v187
    %v219 = vpack.c.b16 %v190, %v189
    %v220 = vpack.c.b16 %v192, %v191
    %v221 = vpack.c.b16 %v194, %v193
    %v222 = vpack.c.b16 %v196, %v195
    %v223 = vpack.c.b16 %v198, %v197
    %v224 = vpack.c.b16 %v200, %v199
    %v225 = vpack.c.b16 %v202, %v201
    %v226 = vpack.c.b16 %v204, %v203
    %v227 = vpack.c.b16 %v206, %v205
    %v228 = vpack.c.b16 %v208, %v207
    %v229 = vpack.c.b16 %v210, %v209
    %v230 = vpack.c.b16 %v212, %v211
    %v231 = vpack.c.b16 %v214, %v213
    %v232 = vpack.c.b16 %v216, %v215
    %249 = vmatprep.subr.bf16.mxu0 0
    %250 = vmatpush1.bf16.msra.mxu0 %v217
    %251 = vmatprep.subr.bf16.mxu0 0
    %252 = vmatpush1.bf16.msra.mxu0 %v218
    %253 = vmatprep.subr.bf16.mxu0 0
    %254 = vmatpush1.bf16.msra.mxu0 %v219
    %255 = vmatprep.subr.bf16.mxu0 0
    %256 = vmatpush1.bf16.msra.mxu0 %v220
    %257 = vmatprep.subr.bf16.mxu0 0
    %258 = vmatpush1.bf16.msra.mxu0 %v221
    %259 = vmatprep.subr.bf16.mxu0 0
    %260 = vmatpush1.bf16.msra.mxu0 %v222
    %261 = vmatprep.subr.bf16.mxu0 0
    %262 = vmatpush1.bf16.msra.mxu0 %v223
    %263 = vmatprep.subr.bf16.mxu0 0
    %264 = vmatpush1.bf16.msra.mxu0 %v224
    %265 = vmatprep.subr.bf16.mxu0 0
    %266 = vmatpush1.bf16.msra.mxu0 %v225
    %267 = vmatprep.subr.bf16.mxu0 0
    %268 = vmatpush1.bf16.msra.mxu0 %v226
    %269 = vmatprep.subr.bf16.mxu0 0
    %270 = vmatpush1.bf16.msra.mxu0 %v227
    %271 = vmatprep.subr.bf16.mxu0 0
    %272 = vmatpush1.bf16.msra.mxu0 %v228
    %273 = vmatprep.subr.bf16.mxu0 0
    %274 = vmatpush1.bf16.msra.mxu0 %v229
    %275 = vmatprep.subr.bf16.mxu0 0
    %276 = vmatpush1.bf16.msra.mxu0 %v230
    %277 = vmatprep.subr.bf16.mxu0 0
    %278 = vmatpush1.bf16.msra.mxu0 %v231
    %279 = vmatprep.subr.bf16.mxu0 0
    %280 = vmatpush1.bf16.msra.mxu0 %v232
    %281 = vmatprep.mubr.bf16.mxu0 %v113
    %282 = vmatmul.mubr.bf16.gmra.mrb[0].mxu0 %v112
    %v283 = vpop.f32.mrb[0].mxu0
    %v284 = vadd.f32 %v151, %v283
    %v285 = vpop.f32.mrb[0].mxu0
    %v286 = vpop.f32.mrb[0].mxu0
    %v287 = vpop.f32.mrb[0].mxu0
    %288 = vdwg.mxu0
    %v289 = vmax.f32 %v284, 0.0
    %v290 = vpack.c.bf16 %v289, %v289
    %v291 = vld [vmem:[%s5] sm:$0xf]
    %v292 = vld [vmem:[%s5 + $0x4] sm:$0xf]
    %v293 = vld [vmem:[%s5 + $0x8] sm:$0xf]
    %v294 = vld [vmem:[%s5 + $0xc] sm:$0xf]
    %v295 = vld [vmem:[%s5 + $0x10] sm:$0xf]
    %v296 = vld [vmem:[%s5 + $0x14] sm:$0xf]
    %v297 = vld [vmem:[%s5 + $0x18] sm:$0xf]
    %v298 = vld [vmem:[%s5 + $0x1c] sm:$0xf]
    %v299 = vld [vmem:[%s6] sm:$0x1]
    %v301 = vlaneseq
    %v302 = vshrl.u32 %v301, 7
    %v303 = vsub.s32 0, %v302
    %v304 = vrot.slane %v299, %v303
    %v314 = vunpack.c.l.b16 %v291
    %v315 = vunpack.c.l.b16 %v292
    %v316 = vunpack.c.l.b16 %v293
    %v317 = vunpack.c.l.b16 %v294
    %v318 = vunpack.c.l.b16 %v295
    %v319 = vunpack.c.l.b16 %v296
    %v320 = vunpack.c.l.b16 %v297
    %v321 = vunpack.c.l.b16 %v298
    %v322 = vpack.c.b16 %v315, %v314
    %v323 = vpack.c.b16 %v317, %v316
    %v324 = vpack.c.b16 %v319, %v318
    %v325 = vpack.c.b16 %v321, %v320
    %vm330 = vcmask 523264
    %v332 = vsel %vm330, %v290, 0
    %334 = vmatprep.subr.bf16.mxu0 0
    %335 = vmatpush1.bf16.msra.mxu0 %v322
    %336 = vmatprep.subr.bf16.mxu0 0
    %337 = vmatpush1.bf16.msra.mxu0 %v323
    %338 = vmatprep.subr.bf16.mxu0 0
    %339 = vmatpush1.bf16.msra.mxu0 %v324
    %340 = vmatprep.subr.bf16.mxu0 0
    %341 = vmatpush1.bf16.msra.mxu0 %v325
    %342 = vmatprep.subr.bf16.mxu0 0
    %343 = vmatpush1.bf16.msra.mxu0 0
    %344 = vmatprep.subr.bf16.mxu0 0
    %345 = vmatpush1.bf16.msra.mxu0 0
    %346 = vmatprep.subr.bf16.mxu0 0
    %347 = vmatpush1.bf16.msra.mxu0 0
    %348 = vmatprep.subr.bf16.mxu0 0
    %349 = vmatpush1.bf16.msra.mxu0 0
    %350 = vmatprep.subr.bf16.mxu0 0
    %351 = vmatpush1.bf16.msra.mxu0 0
    %352 = vmatprep.subr.bf16.mxu0 0
    %353 = vmatpush1.bf16.msra.mxu0 0
    %354 = vmatprep.subr.bf16.mxu0 0
    %355 = vmatpush1.bf16.msra.mxu0 0
    %356 = vmatprep.subr.bf16.mxu0 0
    %357 = vmatpush1.bf16.msra.mxu0 0
    %358 = vmatprep.subr.bf16.mxu0 0
    %359 = vmatpush1.bf16.msra.mxu0 0
    %360 = vmatprep.subr.bf16.mxu0 0
    %361 = vmatpush1.bf16.msra.mxu0 0
    %362 = vmatprep.subr.bf16.mxu0 0
    %363 = vmatpush1.bf16.msra.mxu0 0
    %364 = vmatprep.subr.bf16.mxu0 0
    %365 = vmatpush1.bf16.msra.mxu0 0
    %366 = vmatprep.mubr.bf16.mxu0 0
    %367 = vmatmul.mubr.bf16.gmra.mrb[0].mxu0 %v332
    %v368 = vpop.f32.mrb[0].mxu0
    %v369 = vadd.f32 %v304, %v368
    %v370 = vpop.f32.mrb[0].mxu0
    %v371 = vpop.f32.mrb[0].mxu0
    %v372 = vpop.f32.mrb[0].mxu0
    %373 = vdwg.mxu0
    %374 = vst [vmem:[#allocation2] sm:$0xff] %v369
    // Predicated region
    $region30: #{tpu_custom_call.1} parent=1 // pred_check
      _
    $region31: #{tpu_custom_call.1} parent=1 // pred_check_branch
      %376 = sbr.rel (0) target = $region33
    $region32: #{tpu_custom_call.1} parent=1 // pred_region
      %s378 = ssub.s32 128, 128
      %379 = vsyncadd [#allocation3], %s378
      %s381 = sshll.u32 [#allocation2], 4
      %s382 = int_to_ptr.vmem [resolvable:$true] %s381
      %384 = dma.vmem_to_hbm [thread:$0]  %s382, 128, %s7, [#allocation3]
    $region33: #{tpu_custom_call.1} parent=1 // pred_fallthru
      _
    // Predicated region
    $region34: #{tpu_custom_call.1} parent=1 // pred_check
      _
    $region35: #{tpu_custom_call.1} parent=1 // pred_check_branch
      %386 = sbr.rel (0) target = $region37
    $region36: #{tpu_custom_call.1} parent=1 // pred_region
      %387 = dma.done [#allocation3], 128
    $region37: #{tpu_custom_call.1} parent=1 // pred_fallthru
      _
    %388 = vsyncpa [#allocation3], 1

</llo_original>
